<compile_context>
chip_gen: v5e
topology: v5e:2x2
jax: 0.10.0
libtpu: 0.0.40
codegen_flags: <defaults>
</compile_context>

<pallas_src>
import numpy as np
import jax
import jax.numpy as jnp
from jax.experimental import pallas as pl
from jax.experimental.pallas import tpu as pltpu


def _elu(x):
    # exp(min(x,0))-1 instead of expm1 (same form in kernel and reference).
    return jnp.where(x > 0, x, jnp.exp(jnp.minimum(x, 0.0)) - 1.0)


def end_node_selector_kernel(xt_ref, ahat_ref, src_ref, emask_ref,
                             w1t_ref, w2t_ref, drop_ref, params_ref,
                             eprob_ref, h2t_ref, g_ref):
    ahat_t = ahat_ref[...]                                   # (Np, Np) bf16, Ahat^T
    bf = ahat_t.dtype
    hid = w1t_ref.shape[0]
    out = w2t_ref.shape[0]
    npad = ahat_t.shape[0]

    # Packed small parameters: [b1 | b2 | W_fc | b_fc] as one f32 column.
    b1 = params_ref[0:hid, :]                                # (H, 1)
    b2 = params_ref[hid:hid + out, :]                        # (O, 1)
    wfc = params_ref[hid + out:hid + 2 * out, :]             # (O, 1)
    bfc = params_ref[hid + 2 * out:hid + 2 * out + 1, :]     # (1, 1)

    # conv1 (transposed): h1^T = W1^T @ X^T @ Ahat^T + b1
    t1 = jnp.dot(w1t_ref[...], xt_ref[...],
                 preferred_element_type=jnp.float32)          # (H, Np) f32
    h1t = jnp.dot(t1.astype(bf), ahat_t,
                  preferred_element_type=jnp.float32) + b1    # (H, Np) f32

    # x1[candidates] = h1[s_node]  ->  one-hot gather matmul (f32, exact).
    # src == -1 marks non-candidate / padded lanes -> all-zero one-hot column.
    iota = jax.lax.broadcasted_iota(jnp.int32, (npad, npad), 0)
    onehot = (iota == src_ref[...]).astype(jnp.float32)       # (Np, Np)
    x1t = jnp.dot(h1t, onehot, preferred_element_type=jnp.float32)

    # ELU + dropout(p=0.5, prescaled mask), stacked into (2H, Np) bf16 scratch.
    g_ref[0:hid, :] = (_elu(h1t) * drop_ref[0:hid, :]).astype(bf)
    g_ref[hid:2 * hid, :] = (_elu(x1t) * drop_ref[hid:2 * hid, :]).astype(bf)

    # conv2 (transposed), single K=2H matmul:  W2^T @ [h1;x1]^T @ Ahat^T + b2
    xw2t = jnp.dot(w2t_ref[...], g_ref[...],
                   preferred_element_type=jnp.float32)         # (O, Np) f32
    h2t = jnp.dot(xw2t.astype(bf), ahat_t,
                  preferred_element_type=jnp.float32) + b2
    h2t = _elu(h2t)
    h2t_ref[...] = h2t                                         # lane-dense store

    # fc (Linear(O, 1)): VPU multiply + sublane reduce; nodes stay on lanes.
    ep = jnp.sum(h2t * wfc, axis=0, keepdims=True) + bfc       # (1, Np)

    # masked_fill(e_mask, -1e9) + log_softmax over the node (lane) axis.
    ep = jnp.where(emask_ref[...] > 0, jnp.float32(-1e9), ep)
    m = jnp.max(ep, axis=1, keepdims=True)
    lse = jnp.log(jnp.sum(jnp.exp(ep - m), axis=1, keepdims=True)) + m
    eprob_ref[...] = ep - lse                                  # (1, Np) unmasked store


def end_node_selector_forward(xt, ahat_t, src_idx, e_mask, w1t, w2t, drop, params):
    feat, npad = xt.shape
    hid = w1t.shape[0]
    out = w2t.shape[0]
    p = params.shape[0]

    def full(shape):
        return pl.BlockSpec(shape, lambda i, _nd=len(shape): (0,) * _nd)

    ahat_spec = pl.BlockSpec((npad, npad), lambda i: (0, 0),
                             pipeline_mode=pl.Buffered(1))     # single-buffer big tile

    return pl.pallas_call(
        end_node_selector_kernel,
        out_shape=(jax.ShapeDtypeStruct((1, npad), jnp.float32),
                   jax.ShapeDtypeStruct((out, npad), jnp.float32)),
        grid=(1,),
        in_specs=[full((feat, npad)),       # x^T               bf16
                  ahat_spec,                # Ahat^T            bf16 (single-buffered)
                  full((1, npad)),          # gather index      int32 (-1 = none)
                  full((1, npad)),          # e_mask (1=masked) bf16
                  full((hid, feat)),        # W1^T              bf16
                  full((out, 2 * hid)),     # W2^T (whole)      bf16
                  full((2 * hid, npad)),    # dropout mask, both halves, bf16
                  full((p, 1))],            # packed b1|b2|Wfc|bfc  f32
        out_specs=(full((1, npad)), full((out, npad))),
        scratch_shapes=[pltpu.VMEM((2 * hid, npad), jnp.bfloat16)],
        compiler_params=pltpu.CompilerParams(
            dimension_semantics=("arbitrary",),
            vmem_limit_bytes=32 * 1024 * 1024),
    )(xt, ahat_t, src_idx, e_mask, w1t, w2t, drop, params)


# ------------------------- plain-JAX / numpy glue --------------------------

def build_gcn_norm_adj(edge_index, n):
    """Dense symmetric GCN normalisation: D^-1/2 (A + I) D^-1/2, A[dst,src]=1."""
    a = np.zeros((n, n), np.float32)
    src, dst = np.asarray(edge_index)
    a[dst, src] = 1.0
    a = a + np.eye(n, dtype=np.float32)
    deg = a.sum(axis=1)
    dinv = 1.0 / np.sqrt(np.maximum(deg, 1.0))
    return a * dinv[:, None] * dinv[None, :]


def build_gather_index(s_mapping, all_edge_index, n):
    """src[c] = s_gen for candidates c of s_org (last write wins); 0/1 cand mask."""
    src = np.zeros((n,), np.int32)
    cand = np.zeros((n,), np.float32)
    s_mapping = np.asarray(s_mapping)
    ae = np.asarray(all_edge_index)
    for idx in range(s_mapping.shape[1]):
        s_gen = int(s_mapping[0, idx])
        s_org = int(s_mapping[1, idx])
        for c in ae[1][ae[0] == s_org]:
            src[int(c)] = s_gen
            cand[int(c)] = 1.0
    return src, cand


def reference_forward(x, ahat, src, cand, w1, b1, drop, w2, b2, wfc, bfc, maskf):
    """Node-major pure-JAX reference mirroring the kernel's mixed precision."""
    bf = jnp.bfloat16
    xw1 = jnp.dot(x.astype(bf), w1.astype(bf), preferred_element_type=jnp.float32)
    h1 = jnp.dot(ahat.astype(bf), xw1.astype(bf),
                 preferred_element_type=jnp.float32) + b1
    x1 = cand[:, None] * jnp.take(h1, src, axis=0)
    xc = jnp.concatenate([h1, x1], axis=1)
    xc = _elu(xc) * drop
    xw2 = jnp.dot(xc.astype(bf), w2.astype(bf), preferred_element_type=jnp.float32)
    h2 = jnp.dot(ahat.astype(bf), xw2.astype(bf),
                 preferred_element_type=jnp.float32) + b2
    h2 = _elu(h2)
    ep = h2 @ wfc + bfc
    ep = jnp.where(maskf > 0, -1e9, ep)
    return jax.nn.log_softmax(ep, axis=0), h2


if __name__ == "__main__":
    # Small, module-consistent shapes.
    N = 32          # real nodes in the batched graph
    NP = 128        # node axis padded to a lane-dense multiple of 128
    FEAT = 32       # input_dim
    HID = 16        # hidden_dim
    OUT = 16        # output_dim

    key = jax.random.PRNGKey(0)
    ks = jax.random.split(key, 10)

    # Deterministic synthetic graph data.
    x = jax.random.normal(ks[0], (N, FEAT), jnp.float32)
    edge_index = jax.random.randint(ks[1], (2, 48), 0, N)
    all_edge_index = jax.random.randint(ks[2], (2, 40), 0, N)
    s_mapping = jnp.stack([jax.random.randint(ks[3], (4,), 0, N),
                           jax.random.randint(ks[4], (4,), 0, N)], axis=0)
    e_mask = jax.random.bernoulli(ks[5], 0.6, (N, 1))          # True => masked

    # Deterministic parameter init (GCNConv weights + biases, fc).
    w1 = 0.1 * jax.random.normal(ks[6], (FEAT, HID), jnp.float32)
    b1 = jnp.zeros((1, HID), jnp.float32)
    w2 = 0.1 * jax.random.normal(ks[7], (2 * HID, OUT), jnp.float32)
    b2 = jnp.zeros((1, OUT), jnp.float32)
    wfc = 0.1 * jax.random.normal(ks[8], (OUT, 1), jnp.float32)
    bfc = jnp.zeros((1, 1), jnp.float32)

    # Deterministic dropout keep-mask (p=0.5), pre-scaled by 1/(1-p)=2.
    drop = jax.random.bernoulli(ks[9], 0.5, (N, 2 * HID)).astype(jnp.float32) * 2.0

    ahat = build_gcn_norm_adj(edge_index, N)                   # (N, N) np.f32
    src, cand = build_gather_index(s_mapping, all_edge_index, N)
    maskf = e_mask.astype(jnp.float32)                         # (N, 1)

    # ---- padded / transposed / mixed-precision kernel operands ----
    bf = jnp.bfloat16
    xt = jnp.zeros((FEAT, NP), jnp.float32).at[:, :N].set(x.T).astype(bf)
    ahat_t = jnp.zeros((NP, NP), jnp.float32).at[:N, :N].set(
        jnp.asarray(ahat).T).astype(bf)
    # Fold candidate mask into the gather index: -1 => not a candidate / padding.
    src_fold = np.where(cand > 0, src, -1).astype(np.int32)
    src_p = jnp.full((1, NP), -1, jnp.int32).at[0, :N].set(jnp.asarray(src_fold))
    emask_p = jnp.ones((1, NP), jnp.float32).at[0, :N].set(maskf[:, 0]).astype(bf)
    w1t = w1.T.astype(bf)                                      # (HID, FEAT)
    w2t = w2.T.astype(bf)                                      # (OUT, 2*HID)
    drop_p = jnp.zeros((2 * HID, NP), jnp.float32).at[:, :N].set(drop.T).astype(bf)
    params = jnp.concatenate([b1.T, b2.T, wfc, bfc], axis=0)   # (HID+2*OUT+1, 1) f32

    ep_t, h2_t = end_node_selector_forward(
        xt, ahat_t, src_p, emask_p, w1t, w2t, drop_p, params)
    jax.block_until_ready((ep_t, h2_t))

    # Layout plumbing back to the module's node-major shapes.
    e_prob = ep_t[0, :N][:, None]                              # (N, 1)
    h2 = h2_t[:, :N].T                                         # (N, OUT)

    e_ref, h_ref = reference_forward(
        x, jnp.asarray(ahat), jnp.asarray(src), jnp.asarray(cand),
        w1, b1, drop, w2, b2, wfc, bfc, maskf)
    np.testing.assert_allclose(np.asarray(e_prob), np.asarray(e_ref),
                               rtol=2e-3, atol=2e-3)
    np.testing.assert_allclose(np.asarray(h2), np.asarray(h_ref),
                               rtol=2e-3, atol=2e-3)

    print("KERNEL_OK")
</pallas_src>

<mosaic_0001>
module attributes {stable_mosaic.version = 11 : i64} {
  func.func @end_node_selector_kernel(%arg0: i32, %arg1: memref<32x128xbf16, #tpu.memory_space<vmem>>, %arg2: memref<128x128xbf16, #tpu.memory_space<vmem>>, %arg3: memref<1x128xi32, #tpu.memory_space<vmem>>, %arg4: memref<1x128xbf16, #tpu.memory_space<vmem>>, %arg5: memref<16x32xbf16, #tpu.memory_space<vmem>>, %arg6: memref<16x32xbf16, #tpu.memory_space<vmem>>, %arg7: memref<32x128xbf16, #tpu.memory_space<vmem>>, %arg8: memref<49x1xf32, #tpu.memory_space<vmem>>, %arg9: memref<1x128xf32, #tpu.memory_space<vmem>>, %arg10: memref<16x128xf32, #tpu.memory_space<vmem>>, %arg11: memref<32x128xbf16, #tpu.memory_space<vmem>>) attributes {dimension_semantics = [#tpu.dimension_semantics<arbitrary>], iteration_bounds = array<i64: 1>, scalar_prefetch = 0 : i64, scratch_operands = 1 : i64, tpu.core_type = #tpu.core_type<tc>, window_params = [{pipeline_mode = #tpu.pipeline_mode<synchronous>, transform_indices = @transform_0, window_bounds = array<i64: 32, 128>}, {pipeline_mode = #tpu.pipeline_mode<synchronous>, transform_indices = @transform_1, window_bounds = array<i64: 128, 128>}, {pipeline_mode = #tpu.pipeline_mode<synchronous>, transform_indices = @transform_2, window_bounds = array<i64: 1, 128>}, {pipeline_mode = #tpu.pipeline_mode<synchronous>, transform_indices = @transform_3, window_bounds = array<i64: 1, 128>}, {pipeline_mode = #tpu.pipeline_mode<synchronous>, transform_indices = @transform_4, window_bounds = array<i64: 16, 32>}, {pipeline_mode = #tpu.pipeline_mode<synchronous>, transform_indices = @transform_5, window_bounds = array<i64: 16, 32>}, {pipeline_mode = #tpu.pipeline_mode<synchronous>, transform_indices = @transform_6, window_bounds = array<i64: 32, 128>}, {pipeline_mode = #tpu.pipeline_mode<synchronous>, transform_indices = @transform_7, window_bounds = array<i64: 49, 1>}, {pipeline_mode = #tpu.pipeline_mode<synchronous>, transform_indices = @transform_8, window_bounds = array<i64: 1, 128>}, {pipeline_mode = #tpu.pipeline_mode<synchronous>, transform_indices = @transform_9, window_bounds = array<i64: 16, 128>}]} {
    %c0 = arith.constant 0 : index
    %c0_0 = arith.constant 0 : index
    %0 = vector.load %arg2[%c0, %c0_0] : memref<128x128xbf16, #tpu.memory_space<vmem>>, vector<128x128xbf16>
    %c0_1 = arith.constant 0 : index
    %c0_2 = arith.constant 0 : index
    %1 = vector.load %arg8[%c0_1, %c0_2] : memref<49x1xf32, #tpu.memory_space<vmem>>, vector<16x1xf32>
    %c16 = arith.constant 16 : index
    %c0_3 = arith.constant 0 : index
    %2 = vector.load %arg8[%c16, %c0_3] : memref<49x1xf32, #tpu.memory_space<vmem>>, vector<16x1xf32>
    %c32 = arith.constant 32 : index
    %c0_4 = arith.constant 0 : index
    %3 = vector.load %arg8[%c32, %c0_4] : memref<49x1xf32, #tpu.memory_space<vmem>>, vector<16x1xf32>
    %c48 = arith.constant 48 : index
    %c0_5 = arith.constant 0 : index
    %4 = vector.load %arg8[%c48, %c0_5] : memref<49x1xf32, #tpu.memory_space<vmem>>, vector<1x1xf32>
    %c0_6 = arith.constant 0 : index
    %c0_7 = arith.constant 0 : index
    %5 = vector.load %arg5[%c0_6, %c0_7] : memref<16x32xbf16, #tpu.memory_space<vmem>>, vector<16x32xbf16>
    %c0_8 = arith.constant 0 : index
    %c0_9 = arith.constant 0 : index
    %6 = vector.load %arg1[%c0_8, %c0_9] : memref<32x128xbf16, #tpu.memory_space<vmem>>, vector<32x128xbf16>
    %cst = arith.constant dense<0.000000e+00> : vector<16x128xf32>
    %7 = tpu.matmul %5, %6, %cst {dimension_numbers = #tpu.dot_dimension_numbers<[1], [0], [0], [1], [0, 0, 1, 1], [], []>} : vector<16x32xbf16>, vector<32x128xbf16>, vector<16x128xf32> -> vector<16x128xf32>
    %8 = arith.truncf %7 : vector<16x128xf32> to vector<16x128xbf16>
    %cst_10 = arith.constant dense<0.000000e+00> : vector<16x128xf32>
    %9 = tpu.matmul %8, %0, %cst_10 {dimension_numbers = #tpu.dot_dimension_numbers<[1], [0], [0], [1], [0, 0, 1, 1], [], []>} : vector<16x128xbf16>, vector<128x128xbf16>, vector<16x128xf32> -> vector<16x128xf32>
    %10 = vector.broadcast %1 : vector<16x1xf32> to vector<16x128xf32>
    %11 = arith.addf %9, %10 : vector<16x128xf32>
    %12 = tpu.iota {dimensions = array<i32: 0>} : vector<128x128xi32>
    %c0_11 = arith.constant 0 : index
    %c0_12 = arith.constant 0 : index
    %13 = vector.load %arg3[%c0_11, %c0_12] : memref<1x128xi32, #tpu.memory_space<vmem>>, vector<1x128xi32>
    %14 = vector.broadcast %13 : vector<1x128xi32> to vector<128x128xi32>
    %15 = arith.cmpi eq, %12, %14 : vector<128x128xi32>
    %16 = arith.extui %15 : vector<128x128xi1> to vector<128x128xi32>
    %17 = arith.sitofp %16 : vector<128x128xi32> to vector<128x128xf32>
    %cst_13 = arith.constant dense<0.000000e+00> : vector<16x128xf32>
    %18 = tpu.matmul %11, %17, %cst_13 {dimension_numbers = #tpu.dot_dimension_numbers<[1], [0], [0], [1], [0, 0, 1, 1], [], []>} : vector<16x128xf32>, vector<128x128xf32>, vector<16x128xf32> -> vector<16x128xf32>
    %cst_14 = arith.constant 0.000000e+00 : f32
    %19 = vector.broadcast %cst_14 : f32 to vector<16x128xf32>
    %20 = arith.cmpf ogt, %11, %19 : vector<16x128xf32>
    %cst_15 = arith.constant 0.000000e+00 : f32
    %21 = vector.broadcast %cst_15 : f32 to vector<16x128xf32>
    %22 = arith.minimumf %11, %21 : vector<16x128xf32>
    %23 = math.exp %22 : vector<16x128xf32>
    %cst_16 = arith.constant 1.000000e+00 : f32
    %24 = vector.broadcast %cst_16 : f32 to vector<16x128xf32>
    %25 = arith.subf %23, %24 : vector<16x128xf32>
    %26 = arith.select %20, %11, %25 : vector<16x128xi1>, vector<16x128xf32>
    %c0_17 = arith.constant 0 : index
    %c0_18 = arith.constant 0 : index
    %27 = vector.load %arg7[%c0_17, %c0_18] : memref<32x128xbf16, #tpu.memory_space<vmem>>, vector<16x128xbf16>
    %28 = arith.extf %27 : vector<16x128xbf16> to vector<16x128xf32>
    %29 = arith.mulf %26, %28 : vector<16x128xf32>
    %30 = arith.truncf %29 : vector<16x128xf32> to vector<16x128xbf16>
    %c0_19 = arith.constant 0 : index
    %c0_20 = arith.constant 0 : index
    %31 = vector.load %arg11[%c0_19, %c0_20] : memref<32x128xbf16, #tpu.memory_space<vmem>>, vector<16x128xbf16>
    tpu.vector_store %arg11[%c0_19, %c0_20], %30 {strides = array<i32>} : memref<32x128xbf16, #tpu.memory_space<vmem>>, vector<16x128xbf16>,
    %cst_21 = arith.constant 0.000000e+00 : f32
    %32 = vector.broadcast %cst_21 : f32 to vector<16x128xf32>
    %33 = arith.cmpf ogt, %18, %32 : vector<16x128xf32>
    %cst_22 = arith.constant 0.000000e+00 : f32
    %34 = vector.broadcast %cst_22 : f32 to vector<16x128xf32>
    %35 = arith.minimumf %18, %34 : vector<16x128xf32>
    %36 = math.exp %35 : vector<16x128xf32>
    %cst_23 = arith.constant 1.000000e+00 : f32
    %37 = vector.broadcast %cst_23 : f32 to vector<16x128xf32>
    %38 = arith.subf %36, %37 : vector<16x128xf32>
    %39 = arith.select %33, %18, %38 : vector<16x128xi1>, vector<16x128xf32>
    %c16_24 = arith.constant 16 : index
    %c0_25 = arith.constant 0 : index
    %40 = vector.load %arg7[%c16_24, %c0_25] : memref<32x128xbf16, #tpu.memory_space<vmem>>, vector<16x128xbf16>
    %41 = arith.extf %40 : vector<16x128xbf16> to vector<16x128xf32>
    %42 = arith.mulf %39, %41 : vector<16x128xf32>
    %43 = arith.truncf %42 : vector<16x128xf32> to vector<16x128xbf16>
    %c16_26 = arith.constant 16 : index
    %c0_27 = arith.constant 0 : index
    %44 = vector.load %arg11[%c16_26, %c0_27] : memref<32x128xbf16, #tpu.memory_space<vmem>>, vector<16x128xbf16>
    tpu.vector_store %arg11[%c16_26, %c0_27], %43 {strides = array<i32>} : memref<32x128xbf16, #tpu.memory_space<vmem>>, vector<16x128xbf16>,
    %c0_28 = arith.constant 0 : index
    %c0_29 = arith.constant 0 : index
    %45 = vector.load %arg6[%c0_28, %c0_29] : memref<16x32xbf16, #tpu.memory_space<vmem>>, vector<16x32xbf16>
    %c0_30 = arith.constant 0 : index
    %c0_31 = arith.constant 0 : index
    %46 = vector.load %arg11[%c0_30, %c0_31] : memref<32x128xbf16, #tpu.memory_space<vmem>>, vector<32x128xbf16>
    %cst_32 = arith.constant dense<0.000000e+00> : vector<16x128xf32>
    %47 = tpu.matmul %45, %46, %cst_32 {dimension_numbers = #tpu.dot_dimension_numbers<[1], [0], [0], [1], [0, 0, 1, 1], [], []>} : vector<16x32xbf16>, vector<32x128xbf16>, vector<16x128xf32> -> vector<16x128xf32>
    %48 = arith.truncf %47 : vector<16x128xf32> to vector<16x128xbf16>
    %cst_33 = arith.constant dense<0.000000e+00> : vector<16x128xf32>
    %49 = tpu.matmul %48, %0, %cst_33 {dimension_numbers = #tpu.dot_dimension_numbers<[1], [0], [0], [1], [0, 0, 1, 1], [], []>} : vector<16x128xbf16>, vector<128x128xbf16>, vector<16x128xf32> -> vector<16x128xf32>
    %50 = vector.broadcast %2 : vector<16x1xf32> to vector<16x128xf32>
    %51 = arith.addf %49, %50 : vector<16x128xf32>
    %cst_34 = arith.constant 0.000000e+00 : f32
    %52 = vector.broadcast %cst_34 : f32 to vector<16x128xf32>
    %53 = arith.cmpf ogt, %51, %52 : vector<16x128xf32>
    %cst_35 = arith.constant 0.000000e+00 : f32
    %54 = vector.broadcast %cst_35 : f32 to vector<16x128xf32>
    %55 = arith.minimumf %51, %54 : vector<16x128xf32>
    %56 = math.exp %55 : vector<16x128xf32>
    %cst_36 = arith.constant 1.000000e+00 : f32
    %57 = vector.broadcast %cst_36 : f32 to vector<16x128xf32>
    %58 = arith.subf %56, %57 : vector<16x128xf32>
    %59 = arith.select %53, %51, %58 : vector<16x128xi1>, vector<16x128xf32>
    %c0_37 = arith.constant 0 : index
    %c0_38 = arith.constant 0 : index
    %60 = vector.load %arg10[%c0_37, %c0_38] : memref<16x128xf32, #tpu.memory_space<vmem>>, vector<16x128xf32>
    tpu.vector_store %arg10[%c0_37, %c0_38], %59 {strides = array<i32>} : memref<16x128xf32, #tpu.memory_space<vmem>>, vector<16x128xf32>,
    %61 = vector.broadcast %3 : vector<16x1xf32> to vector<16x128xf32>
    %62 = arith.mulf %59, %61 : vector<16x128xf32>
    %cst_39 = arith.constant dense<0.000000e+00> : vector<128xf32>
    %63 = vector.multi_reduction <add>, %62, %cst_39 [0] : vector<16x128xf32> to vector<128xf32>
    %64 = vector.shape_cast %63 : vector<128xf32> to vector<1x128xf32>
    %65 = vector.broadcast %4 : vector<1x1xf32> to vector<1x128xf32>
    %66 = arith.addf %64, %65 : vector<1x128xf32>
    %c0_40 = arith.constant 0 : index
    %c0_41 = arith.constant 0 : index
    %67 = vector.load %arg4[%c0_40, %c0_41] : memref<1x128xbf16, #tpu.memory_space<vmem>>, vector<1x128xbf16>
    %cst_42 = arith.constant 0.000000e+00 : bf16
    %68 = vector.broadcast %cst_42 : bf16 to vector<1x128xbf16>
    %69 = arith.cmpf ogt, %67, %68 : vector<1x128xbf16>
    %cst_43 = arith.constant -1.000000e+09 : f32
    %70 = vector.broadcast %cst_43 : f32 to vector<1x128xf32>
    %71 = arith.select %69, %70, %66 : vector<1x128xi1>, vector<1x128xf32>
    %cst_44 = arith.constant dense<0xFF800000> : vector<1xf32>
    %72 = vector.multi_reduction <maximumf>, %71, %cst_44 [1] : vector<1x128xf32> to vector<1xf32>
    %73 = vector.shape_cast %72 : vector<1xf32> to vector<1x1xf32>
    %74 = vector.broadcast %73 : vector<1x1xf32> to vector<1x128xf32>
    %75 = arith.subf %71, %74 : vector<1x128xf32>
    %76 = math.exp %75 : vector<1x128xf32>
    %cst_45 = arith.constant dense<0.000000e+00> : vector<1xf32>
    %77 = vector.multi_reduction <add>, %76, %cst_45 [1] : vector<1x128xf32> to vector<1xf32>
    %78 = vector.shape_cast %77 : vector<1xf32> to vector<1x1xf32>
    %79 = math.log %78 : vector<1x1xf32>
    %80 = arith.addf %79, %73 : vector<1x1xf32>
    %81 = vector.broadcast %80 : vector<1x1xf32> to vector<1x128xf32>
    %82 = arith.subf %71, %81 : vector<1x128xf32>
    %c0_46 = arith.constant 0 : index
    %c0_47 = arith.constant 0 : index
    %83 = vector.load %arg9[%c0_46, %c0_47] : memref<1x128xf32, #tpu.memory_space<vmem>>, vector<1x128xf32>
    tpu.vector_store %arg9[%c0_46, %c0_47], %82 {strides = array<i32>} : memref<1x128xf32, #tpu.memory_space<vmem>>, vector<1x128xf32>,
    return
  }
  func.func @transform_0(%arg0: i32) -> (i32, i32) {
    %c0_i32 = arith.constant 0 : i32
    %c0_i32_0 = arith.constant 0 : i32
    %c0_i32_1 = arith.constant 0 : i32
    return %c0_i32, %c0_i32_0 : i32, i32
  }
  func.func @transform_1(%arg0: i32) -> (i32, i32) {
    %c0_i32 = arith.constant 0 : i32
    %c0_i32_0 = arith.constant 0 : i32
    %c0_i32_1 = arith.constant 0 : i32
    return %c0_i32, %c0_i32_0 : i32, i32
  }
  func.func @transform_2(%arg0: i32) -> (i32, i32) {
    %c0_i32 = arith.constant 0 : i32
    %c0_i32_0 = arith.constant 0 : i32
    %c0_i32_1 = arith.constant 0 : i32
    return %c0_i32, %c0_i32_0 : i32, i32
  }
  func.func @transform_3(%arg0: i32) -> (i32, i32) {
    %c0_i32 = arith.constant 0 : i32
    %c0_i32_0 = arith.constant 0 : i32
    %c0_i32_1 = arith.constant 0 : i32
    return %c0_i32, %c0_i32_0 : i32, i32
  }
  func.func @transform_4(%arg0: i32) -> (i32, i32) {
    %c0_i32 = arith.constant 0 : i32
    %c0_i32_0 = arith.constant 0 : i32
    %c0_i32_1 = arith.constant 0 : i32
    return %c0_i32, %c0_i32_0 : i32, i32
  }
  func.func @transform_5(%arg0: i32) -> (i32, i32) {
    %c0_i32 = arith.constant 0 : i32
    %c0_i32_0 = arith.constant 0 : i32
    %c0_i32_1 = arith.constant 0 : i32
    return %c0_i32, %c0_i32_0 : i32, i32
  }
  func.func @transform_6(%arg0: i32) -> (i32, i32) {
    %c0_i32 = arith.constant 0 : i32
    %c0_i32_0 = arith.constant 0 : i32
    %c0_i32_1 = arith.constant 0 : i32
    return %c0_i32, %c0_i32_0 : i32, i32
  }
  func.func @transform_7(%arg0: i32) -> (i32, i32) {
    %c0_i32 = arith.constant 0 : i32
    %c0_i32_0 = arith.constant 0 : i32
    %c0_i32_1 = arith.constant 0 : i32
    return %c0_i32, %c0_i32_0 : i32, i32
  }
  func.func @transform_8(%arg0: i32) -> (i32, i32) {
    %c0_i32 = arith.constant 0 : i32
    %c0_i32_0 = arith.constant 0 : i32
    %c0_i32_1 = arith.constant 0 : i32
    return %c0_i32, %c0_i32_0 : i32, i32
  }
  func.func @transform_9(%arg0: i32) -> (i32, i32) {
    %c0_i32 = arith.constant 0 : i32
    %c0_i32_0 = arith.constant 0 : i32
    %c0_i32_1 = arith.constant 0 : i32
    return %c0_i32, %c0_i32_0 : i32, i32
  }
}

</mosaic_0001>

<llo_original>
// kernel: tpu_custom_call.1
$region0: #{tpu_custom_call.1}
  #allocation0 [shape = 'u32[]', space=smem, size = 0x4, offset = 0x4, fixed_abs, tag = 'smem constant byte address 0x4 - core index']
  #allocation1 [shape = 'u32[72,128]{1,0:T(1,128)}', space=vmem, size = 0x9000, scoped, tag = 'internal scratch']
  #allocation2 [shape = 'bf16[32,128]{1,0:T(8,128)(2,1)}', space=vmem, size = 0x2000, scoped, tag = 'scratch operand']
  %s0 = inlined_call_operand.vmem [shape: bf16[32,128], index: 0, kind: input, shape index: {}]
  %s1 = inlined_call_operand.hbm [shape: bf16[128,128], index: 1, kind: input, shape index: {}]
  %s2 = inlined_call_operand.vmem [shape: s32[1,128], index: 2, kind: input, shape index: {}]
  %s3 = inlined_call_operand.vmem [shape: bf16[1,128], index: 3, kind: input, shape index: {}]
  %s4 = inlined_call_operand.vmem [shape: bf16[16,32], index: 4, kind: input, shape index: {}]
  %s5 = inlined_call_operand.vmem [shape: bf16[16,32], index: 5, kind: input, shape index: {}]
  %s6 = inlined_call_operand.vmem [shape: bf16[32,128], index: 6, kind: input, shape index: {}]
  %s7 = inlined_call_operand.vmem [shape: f32[49,1], index: 7, kind: input, shape index: {}]
  %s8 = inlined_call_operand.hbm [shape: f32[1,128], index: 8, kind: output, shape index: {0}]
  %s9 = inlined_call_operand.hbm [shape: f32[16,128], index: 9, kind: output, shape index: {1}]
  %10 = xla_tuple %s8, %s9
  %s11 = sld [smem:[#allocation0]]
  $region54: #{tpu_custom_call.1} parent=0
    _
  %s13 = ssub.s32 1, %s11
  %s14 = scalar_select 0, %s13, %s11
  $region1: #{tpu_custom_call.1} parent=0
    #allocation3 [shape = 'u8[32768]{0}', space=vmem, size = 0x8000, scoped, tag = 'input window, operand 1, single buffered']
    #allocation4 [shape = 's32[1]{0}', space=sflag, size = 0x4, scoped, tag = 'scoped memory for tpu_custom_call.1']
    #allocation5 [shape = 's32[1]{0}', space=sflag, size = 0x4, scoped, tag = 'scoped memory for tpu_custom_call.1']
    #allocation6 [shape = 'u8[512]{0}', space=vmem, size = 0x400, scoped, tag = 'output window, operand 0, single buffered']
    #allocation7 [shape = 'u8[8192]{0}', space=vmem, size = 0x2000, scoped, tag = 'output window, operand 1, single buffered']
    #allocation8 [shape = 's32[1]{0}', space=sflag, size = 0x4, scoped, tag = 'scoped memory for tpu_custom_call.1']
    %15 = vsyncpa [#allocation4], 0
    %16 = vsyncpa [#allocation5], 0
    %17 = vsyncpa [#allocation8], 0
    // Predicated region
    $region2: #{tpu_custom_call.1} parent=1 // pred_check
      _
    $region3: #{tpu_custom_call.1} parent=1 // pred_check_branch
      %19 = sbr.rel (0) target = $region5
    $region4: #{tpu_custom_call.1} parent=1 // pred_region
      _
    $region5: #{tpu_custom_call.1} parent=1 // pred_fallthru
      _
    // Predicated region
    $region6: #{tpu_custom_call.1} parent=1 // pred_check
      _
    $region7: #{tpu_custom_call.1} parent=1 // pred_check_branch
      %21 = sbr.rel (0) target = $region9
    $region8: #{tpu_custom_call.1} parent=1 // pred_region
      %23 = vsyncadd [#allocation4], 0
      %s24 = sshll.u32 %s1, 4
      %s25 = int_to_ptr.hbm [resolvable:$true] %s24
      %s26 = sshll.u32 [#allocation3], 4
      %s27 = int_to_ptr.vmem [resolvable:$true] %s26
      %32 = dma.hbm_to_vmem [thread:$0]  %s25, 1024, %s27, [#allocation4], 64, 64, 4
    $region9: #{tpu_custom_call.1} parent=1 // pred_fallthru
      _
    // Predicated region
    $region10: #{tpu_custom_call.1} parent=1 // pred_check
      _
    $region11: #{tpu_custom_call.1} parent=1 // pred_check_branch
      %34 = sbr.rel (0) target = $region13
    $region12: #{tpu_custom_call.1} parent=1 // pred_region
      _
    $region13: #{tpu_custom_call.1} parent=1 // pred_fallthru
      _
    // Predicated region
    $region14: #{tpu_custom_call.1} parent=1 // pred_check
      _
    $region15: #{tpu_custom_call.1} parent=1 // pred_check_branch
      %36 = sbr.rel (0) target = $region17
    $region16: #{tpu_custom_call.1} parent=1 // pred_region
      _
    $region17: #{tpu_custom_call.1} parent=1 // pred_fallthru
      _
    // Predicated region
    $region18: #{tpu_custom_call.1} parent=1 // pred_check
      _
    $region19: #{tpu_custom_call.1} parent=1 // pred_check_branch
      %38 = sbr.rel (0) target = $region21
    $region20: #{tpu_custom_call.1} parent=1 // pred_region
      _
    $region21: #{tpu_custom_call.1} parent=1 // pred_fallthru
      _
    // Predicated region
    $region22: #{tpu_custom_call.1} parent=1 // pred_check
      _
    $region23: #{tpu_custom_call.1} parent=1 // pred_check_branch
      %40 = sbr.rel (0) target = $region25
    $region24: #{tpu_custom_call.1} parent=1 // pred_region
      _
    $region25: #{tpu_custom_call.1} parent=1 // pred_fallthru
      _
    // Predicated region
    $region26: #{tpu_custom_call.1} parent=1 // pred_check
      _
    $region27: #{tpu_custom_call.1} parent=1 // pred_check_branch
      %42 = sbr.rel (0) target = $region29
    $region28: #{tpu_custom_call.1} parent=1 // pred_region
      _
    $region29: #{tpu_custom_call.1} parent=1 // pred_fallthru
      _
    // Predicated region
    $region30: #{tpu_custom_call.1} parent=1 // pred_check
      _
    $region31: #{tpu_custom_call.1} parent=1 // pred_check_branch
      %44 = sbr.rel (0) target = $region33
    $region32: #{tpu_custom_call.1} parent=1 // pred_region
      _
    $region33: #{tpu_custom_call.1} parent=1 // pred_fallthru
      _
    // Predicated region
    $region34: #{tpu_custom_call.1} parent=1 // pred_check
      _
    $region35: #{tpu_custom_call.1} parent=1 // pred_check_branch
      %46 = sbr.rel (0) target = $region37
    $region36: #{tpu_custom_call.1} parent=1 // pred_region
      %48 = dma.done [#allocation4], 1024
    $region37: #{tpu_custom_call.1} parent=1 // pred_fallthru
      _
    %v50 = vld [vmem:[#allocation3] sm:$0xf]
    %v51 = vld [vmem:[#allocation3 + $0x4] sm:$0xf]
    %v52 = vld [vmem:[#allocation3 + $0x8] sm:$0xf]
    %v53 = vld [vmem:[#allocation3 + $0xc] sm:$0xf]
    %v54 = vld [vmem:[#allocation3 + $0x10] sm:$0xf]
    %v55 = vld [vmem:[#allocation3 + $0x14] sm:$0xf]
    %v56 = vld [vmem:[#allocation3 + $0x18] sm:$0xf]
    %v57 = vld [vmem:[#allocation3 + $0x1c] sm:$0xf]
    %v58 = vld [vmem:[#allocation3 + $0x20] sm:$0xf]
    %v59 = vld [vmem:[#allocation3 + $0x24] sm:$0xf]
    %v60 = vld [vmem:[#allocation3 + $0x28] sm:$0xf]
    %v61 = vld [vmem:[#allocation3 + $0x2c] sm:$0xf]
    %v62 = vld [vmem:[#allocation3 + $0x30] sm:$0xf]
    %v63 = vld [vmem:[#allocation3 + $0x34] sm:$0xf]
    %v64 = vld [vmem:[#allocation3 + $0x38] sm:$0xf]
    %v65 = vld [vmem:[#allocation3 + $0x3c] sm:$0xf]
    %v66 = vld [vmem:[%s7] sm:$0xff]
    %v67 = vld [vmem:[%s7 + $0x8] sm:$0xff]
    %v68 = vld [vmem:[%s7 + $0x10] sm:$0xff]
    %v69 = vld [vmem:[%s7 + $0x18] sm:$0xff]
    %v70 = vld [vmem:[%s7 + $0x20] sm:$0xff]
    %v71 = vld [vmem:[%s7 + $0x28] sm:$0xff]
    %v72 = vld [vmem:[%s7 + $0x30] sm:$0x1]
    %v73 = vld [vmem:[%s4] sm:$0xf]
    %v74 = vld [vmem:[%s4 + $0x4] sm:$0xf]
    %v75 = vld [vmem:[%s0] sm:$0xf]
    %v76 = vld [vmem:[%s0 + $0x4] sm:$0xf]
    %v77 = vld [vmem:[%s0 + $0x8] sm:$0xf]
    %v78 = vld [vmem:[%s0 + $0xc] sm:$0xf]
    %v81 = vunpack.c.l.b16 %v73
    %v82 = vunpack.c.l.b16 %v74
    %v83 = vpack.c.b16 %v82, %v81
    %v88 = vunpack.c.l.b16 %v75
    %v89 = vunpack.c.l.b16 %v76
    %v90 = vunpack.c.l.b16 %v77
    %v91 = vunpack.c.l.b16 %v78
    %v92 = vpack.c.b16 %v89, %v88
    %v93 = vpack.c.b16 %v91, %v90
    %vm96 = vcmask 261120
    %v98 = vsel %vm96, %v83, 0
    %100 = vmatpush.bf16.msra.mxu0 0
    %101 = vmatpush.bf16.msra.mxu0 0
    %102 = vmatpush.bf16.msra.mxu0 0
    %103 = vmatpush.bf16.msra.mxu0 0
    %104 = vmatpush.bf16.msra.mxu0 0
    %105 = vmatpush.bf16.msra.mxu0 0
    %106 = vmatpush.bf16.msra.mxu0 %v93
    %107 = vmatpush.bf16.msra.mxu0 %v92
    %108 = vmatmul.bf16.gmra.mxu0 %v98
    %v109 = vpop.f32.mrf.mxu0
    %v110 = vadd.f32 0.0, %v109
    %v111 = vpop.f32.mrf.mxu0
    %v112 = vadd.f32 0.0, %v111
    %113 = vdwg.mxu0
    %v114 = vpack.c.bf16 %v112, %v110
    %116 = vset.pattern.permute.xlu0 0
    %117 = vperm.xlu0 %116, %v66
    %v118 = vpop.permute.xlu0 %117
    %121 = vset.pattern.permute.xlu0 0
    %122 = vperm.xlu0 %121, %v67
    %v123 = vpop.permute.xlu0 %122
    %v141 = vunpack.c.l.b16 %v50
    %v142 = vunpack.c.l.b16 %v51
    %v143 = vunpack.c.l.b16 %v52
    %v144 = vunpack.c.l.b16 %v53
    %v145 = vunpack.c.l.b16 %v54
    %v146 = vunpack.c.l.b16 %v55
    %v147 = vunpack.c.l.b16 %v56
    %v148 = vunpack.c.l.b16 %v57
    %v149 = vunpack.c.l.b16 %v58
    %v150 = vunpack.c.l.b16 %v59
    %v151 = vunpack.c.l.b16 %v60
    %v152 = vunpack.c.l.b16 %v61
    %v153 = vunpack.c.l.b16 %v62
    %v154 = vunpack.c.l.b16 %v63
    %v155 = vunpack.c.l.b16 %v64
    %v156 = vunpack.c.l.b16 %v65
    %v157 = vpack.c.b16 %v142, %v141
    %v158 = vpack.c.b16 %v144, %v143
    %v159 = vpack.c.b16 %v146, %v145
    %v160 = vpack.c.b16 %v148, %v147
    %v161 = vpack.c.b16 %v150, %v149
    %v162 = vpack.c.b16 %v152, %v151
    %v163 = vpack.c.b16 %v154, %v153
    %v164 = vpack.c.b16 %v156, %v155
    %173 = vmatpush.bf16.msra.mxu0 %v164
    %174 = vmatpush.bf16.msra.mxu0 %v163
    %175 = vmatpush.bf16.msra.mxu0 %v162
    %176 = vmatpush.bf16.msra.mxu0 %v161
    %177 = vmatpush.bf16.msra.mxu0 %v160
    %178 = vmatpush.bf16.msra.mxu0 %v159
    %179 = vmatpush.bf16.msra.mxu0 %v158
    %180 = vmatpush.bf16.msra.mxu0 %v157
    %181 = vmatmul.bf16.gmra.mxu0 %v114
    %v182 = vpop.f32.mrf.mxu0
    %v183 = vadd.f32 %v118, %v182
    %v184 = vpop.f32.mrf.mxu0
    %v185 = vadd.f32 %v123, %v184
    %186 = vdwg.mxu0
    %v187 = vlaneseq
    %v188 = vshrl.u32 %v187, 7
    %v189 = vadd.s32 %v188, 8
    %v190 = vadd.s32 %v188, 16
    %v191 = vadd.s32 %v188, 24
    %v192 = vadd.s32 %v188, 32
    %v193 = vadd.s32 %v188, 40
    %v194 = vadd.s32 %v188, 48
    %v195 = vadd.s32 %v188, 56
    %v196 = vadd.s32 %v188, 64
    %v197 = vadd.s32 %v188, 72
    %v198 = vadd.s32 %v188, 80
    %v199 = vadd.s32 %v188, 88
    %v200 = vadd.s32 %v188, 96
    %v201 = vadd.s32 %v188, 104
    %v202 = vadd.s32 %v188, 112
    %v203 = vadd.s32 %v188, 120
    %v204 = vld [vmem:[%s2] sm:$0x1]
    %v205 = vperm.slane %v204, 0
    %vm206 = vcmp.eq.s32.totalorder %v188, %v205
    %vm207 = vcmp.eq.s32.totalorder %v189, %v205
    %vm208 = vcmp.eq.s32.totalorder %v190, %v205
    %vm209 = vcmp.eq.s32.totalorder %v191, %v205
    %vm210 = vcmp.eq.s32.totalorder %v192, %v205
    %vm211 = vcmp.eq.s32.totalorder %v193, %v205
    %vm212 = vcmp.eq.s32.totalorder %v194, %v205
    %vm213 = vcmp.eq.s32.totalorder %v195, %v205
    %vm214 = vcmp.eq.s32.totalorder %v196, %v205
    %vm215 = vcmp.eq.s32.totalorder %v197, %v205
    %vm216 = vcmp.eq.s32.totalorder %v198, %v205
    %vm217 = vcmp.eq.s32.totalorder %v199, %v205
    %vm218 = vcmp.eq.s32.totalorder %v200, %v205
    %vm219 = vcmp.eq.s32.totalorder %v201, %v205
    %vm220 = vcmp.eq.s32.totalorder %v202, %v205
    %vm221 = vcmp.eq.s32.totalorder %v203, %v205
    %v222 = vsel %vm206, 1, 0
    %v223 = vsel %vm207, 1, 0
    %v224 = vsel %vm208, 1, 0
    %v225 = vsel %vm209, 1, 0
    %v226 = vsel %vm210, 1, 0
    %v227 = vsel %vm211, 1, 0
    %v228 = vsel %vm212, 1, 0
    %v229 = vsel %vm213, 1, 0
    %v230 = vsel %vm214, 1, 0
    %v231 = vsel %vm215, 1, 0
    %v232 = vsel %vm216, 1, 0
    %v233 = vsel %vm217, 1, 0
    %v234 = vsel %vm218, 1, 0
    %v235 = vsel %vm219, 1, 0
    %v236 = vsel %vm220, 1, 0
    %v237 = vsel %vm221, 1, 0
    %v238 = vcvt.s32.f32 %v222
    %v239 = vcvt.s32.f32 %v223
    %v240 = vcvt.s32.f32 %v224
    %v241 = vcvt.s32.f32 %v225
    %v242 = vcvt.s32.f32 %v226
    %v243 = vcvt.s32.f32 %v227
    %v244 = vcvt.s32.f32 %v228
    %v245 = vcvt.s32.f32 %v229
    %v246 = vcvt.s32.f32 %v230
    %v247 = vcvt.s32.f32 %v231
    %v248 = vcvt.s32.f32 %v232
    %v249 = vcvt.s32.f32 %v233
    %v250 = vcvt.s32.f32 %v234
    %v251 = vcvt.s32.f32 %v235
    %v252 = vcvt.s32.f32 %v236
    %v253 = vcvt.s32.f32 %v237
    %254 = vmatpush.msra.mxu0 %v253
    %255 = vmatpush.msra.mxu0 %v252
    %256 = vmatpush.msra.mxu0 %v251
    %257 = vmatpush.msra.mxu0 %v250
    %258 = vmatpush.msra.mxu0 %v249
    %259 = vmatpush.msra.mxu0 %v248
    %260 = vmatpush.msra.mxu0 %v247
    %261 = vmatpush.msra.mxu0 %v246
    %262 = vmatpush.msra.mxu0 %v245
    %263 = vmatpush.msra.mxu0 %v244
    %264 = vmatpush.msra.mxu0 %v243
    %265 = vmatpush.msra.mxu0 %v242
    %266 = vmatpush.msra.mxu0 %v241
    %267 = vmatpush.msra.mxu0 %v240
    %268 = vmatpush.msra.mxu0 %v239
    %269 = vmatpush.msra.mxu0 %v238
    %270 = vmatmul.f32.gmra.mxu0 %v183
    %v271 = vpop.f32.mrf.mxu0
    %v272 = vadd.f32 0.0, %v271
    %273 = vmatmul.f32.gmra.mxu0 %v185
    %v274 = vpop.f32.mrf.mxu0
    %v275 = vadd.f32 0.0, %v274
    %276 = vdwg.mxu0
    %vm277 = vcmp.gt.f32.partialorder %v183, 0.0
    %vm278 = vcmp.gt.f32.partialorder %v185, 0.0
    %v279 = vmin.f32 %v183, 0.0
    %v280 = vmin.f32 %v185, 0.0
    %v281 = vmul.f32 %v279, 1.442695
    %v282 = vpow.pop %v281
    %v283 = vmul.f32 %v280, 1.442695
    %v284 = vpow.pop %v283
    %v285 = vsub.f32 %v282, 1.0
    %v286 = vsub.f32 %v284, 1.0
    %v287 = vsel %vm277, %v183, %v285
    %v288 = vsel %vm278, %v185, %v286
    %v289 = vld [vmem:[%s6] sm:$0xf]
    %v290 = vld [vmem:[%s6 + $0x4] sm:$0xf]
    %v291 = vunpack.c.l.bf16 %v289
    %v292 = vunpack.c.l.bf16 %v290
    %v293 = vmul.f32 %v287, %v291
    %v294 = vmul.f32 %v288, %v292
    %v295 = vpack.c.bf16 %v293, %v293
    %v296 = vpack.c.bf16 %v294, %v294
    %297 = vst [vmem:[#allocation2] sm:$0xf] %v295
    %298 = vst [vmem:[#allocation2 + $0x4] sm:$0xf] %v296
    %vm299 = vcmp.gt.f32.partialorder %v272, 0.0
    %vm300 = vcmp.gt.f32.partialorder %v275, 0.0
    %v301 = vmin.f32 %v272, 0.0
    %v302 = vmin.f32 %v275, 0.0
    %v303 = vmul.f32 %v301, 1.442695
    %v304 = vpow.pop %v303
    %v305 = vmul.f32 %v302, 1.442695
    %v306 = vpow.pop %v305
    %v307 = vsub.f32 %v304, 1.0
    %v308 = vsub.f32 %v306, 1.0
    %v309 = vsel %vm299, %v272, %v307
    %v310 = vsel %vm300, %v275, %v308
    %v311 = vld [vmem:[%s6 + $0x8] sm:$0xf]
    %v312 = vld [vmem:[%s6 + $0xc] sm:$0xf]
    %v313 = vunpack.c.l.bf16 %v311
    %v314 = vunpack.c.l.bf16 %v312
    %v315 = vmul.f32 %v309, %v313
    %v316 = vmul.f32 %v310, %v314
    %v317 = vpack.c.bf16 %v315, %v315
    %v318 = vpack.c.bf16 %v316, %v316
    %319 = vst [vmem:[#allocation2 + $0x8] sm:$0xf] %v317
    %320 = vst [vmem:[#allocation2 + $0xc] sm:$0xf] %v318
    %v321 = vld [vmem:[%s5] sm:$0xf]
    %v322 = vld [vmem:[%s5 + $0x4] sm:$0xf]
    %v323 = vld [vmem:[#allocation2] sm:$0xf]
    %v324 = vld [vmem:[#allocation2 + $0x4] sm:$0xf]
    %v325 = vld [vmem:[#allocation2 + $0x8] sm:$0xf]
    %v326 = vld [vmem:[#allocation2 + $0xc] sm:$0xf]
    %v329 = vunpack.c.l.b16 %v321
    %v330 = vunpack.c.l.b16 %v322
    %v331 = vpack.c.b16 %v330, %v329
    %v336 = vunpack.c.l.b16 %v323
    %v337 = vunpack.c.l.b16 %v324
    %v338 = vunpack.c.l.b16 %v325
    %v339 = vunpack.c.l.b16 %v326
    %v340 = vpack.c.b16 %v337, %v336
    %v341 = vpack.c.b16 %v339, %v338
    %v345 = vsel %vm96, %v331, 0
    %347 = vmatpush.bf16.msra.mxu0 0
    %348 = vmatpush.bf16.msra.mxu0 0
    %349 = vmatpush.bf16.msra.mxu0 0
    %350 = vmatpush.bf16.msra.mxu0 0
    %351 = vmatpush.bf16.msra.mxu0 0
    %352 = vmatpush.bf16.msra.mxu0 0
    %353 = vmatpush.bf16.msra.mxu0 %v341
    %354 = vmatpush.bf16.msra.mxu0 %v340
    %355 = vmatmul.bf16.gmra.mxu0 %v345
    %v356 = vpop.f32.mrf.mxu0
    %v357 = vadd.f32 0.0, %v356
    %v358 = vpop.f32.mrf.mxu0
    %v359 = vadd.f32 0.0, %v358
    %360 = vdwg.mxu0
    %v361 = vpack.c.bf16 %v359, %v357
    %363 = vset.pattern.permute.xlu0 0
    %364 = vperm.xlu0 %363, %v68
    %v365 = vpop.permute.xlu0 %364
    %368 = vset.pattern.permute.xlu0 0
    %369 = vperm.xlu0 %368, %v69
    %v370 = vpop.permute.xlu0 %369
    %372 = vmatpush.bf16.msra.mxu0 %v164
    %373 = vmatpush.bf16.msra.mxu0 %v163
    %374 = vmatpush.bf16.msra.mxu0 %v162
    %375 = vmatpush.bf16.msra.mxu0 %v161
    %376 = vmatpush.bf16.msra.mxu0 %v160
    %377 = vmatpush.bf16.msra.mxu0 %v159
    %378 = vmatpush.bf16.msra.mxu0 %v158
    %379 = vmatpush.bf16.msra.mxu0 %v157
    %380 = vmatmul.bf16.gmra.mxu0 %v361
    %v381 = vpop.f32.mrf.mxu0
    %v382 = vadd.f32 %v365, %v381
    %v383 = vpop.f32.mrf.mxu0
    %v384 = vadd.f32 %v370, %v383
    %385 = vdwg.mxu0
    %vm386 = vcmp.gt.f32.partialorder %v382, 0.0
    %vm387 = vcmp.gt.f32.partialorder %v384, 0.0
    %v388 = vmin.f32 %v382, 0.0
    %v389 = vmin.f32 %v384, 0.0
    %v390 = vmul.f32 %v388, 1.442695
    %v391 = vpow.pop %v390
    %v392 = vmul.f32 %v389, 1.442695
    %v393 = vpow.pop %v392
    %v394 = vsub.f32 %v391, 1.0
    %v395 = vsub.f32 %v393, 1.0
    %v396 = vsel %vm386, %v382, %v394
    %v397 = vsel %vm387, %v384, %v395
    %398 = vst [vmem:[#allocation7] sm:$0xff] %v396
    %399 = vst [vmem:[#allocation7 + $0x8] sm:$0xff] %v397
    %401 = vset.pattern.permute.xlu0 0
    %402 = vperm.xlu0 %401, %v70
    %v403 = vpop.permute.xlu0 %402
    %406 = vset.pattern.permute.xlu0 0
    %407 = vperm.xlu0 %406, %v71
    %v408 = vpop.permute.xlu0 %407
    %v410 = vmul.f32 %v396, %v403
    %v411 = vmul.f32 %v397, %v408
    %v412 = vadd.f32 %v410, %v411
    %v413 = vrot.slane %v412, 4
    %v414 = vadd.f32 %v412, %v413
    %v415 = vrot.slane %v414, 2
    %v416 = vadd.f32 %v414, %v415
    %v417 = vrot.slane %v416, 1
    %v418 = vadd.f32 %v416, %v417
    %420 = vset.pattern.permute.xlu0 0
    %421 = vperm.xlu0 %420, %v72
    %v422 = vpop.permute.xlu0 %421
    %v424 = vadd.f32 %v418, %v422
    %v425 = vld [vmem:[%s3] sm:$0x1]
    %v426 = vunpack.c.l.bf16 %v425
    %vm427 = vcmp.gt.f32.partialorder %v426, 0.0
    %v428 = vsel %vm427, -1e+09, %v424
    %vm429 = vcmask 1040384
    %v430 = vsel %vm429, %v428, -inf
    %431 = vmax.xlane.f32.xlu0 %v430
    %v432 = vpop.xlane.xlu0 %431
    %v433 = vsub.f32 %v428, %v432
    %v434 = vmul.f32 %v433, 1.442695
    %v435 = vpow.pop %v434
    %v436 = vsel %vm429, %v435, 0.0
    %437 = vadd.xlane.f32.xlu0 %v436
    %v438 = vpop.xlane.xlu0 %437
    %v439 = vlog2.pop %v438
    %v440 = vmul.f32 %v439, 0.6931472
    %v441 = vadd.f32 %v440, %v432
    %v442 = vsub.f32 %v428, %v441
    %443 = vst [vmem:[#allocation6] sm:$0x1] %v442
    // Predicated region
    $region38: #{tpu_custom_call.1} parent=1 // pred_check
      _
    $region39: #{tpu_custom_call.1} parent=1 // pred_check_branch
      %445 = sbr.rel (0) target = $region41
    $region40: #{tpu_custom_call.1} parent=1 // pred_region
      %447 = vsyncadd [#allocation5], 0
      %s449 = sshll.u32 [#allocation6], 4
      %s450 = int_to_ptr.vmem [resolvable:$true] %s449
      %s451 = sshll.u32 %s8, 4
      %s452 = int_to_ptr.hbm [resolvable:$true] %s451
      %454 = dma.vmem_to_hbm [thread:$0]  %s450, 16, %s452, [#allocation5]
    $region41: #{tpu_custom_call.1} parent=1 // pred_fallthru
      _
    // Predicated region
    $region42: #{tpu_custom_call.1} parent=1 // pred_check
      _
    $region43: #{tpu_custom_call.1} parent=1 // pred_check_branch
      %456 = sbr.rel (0) target = $region45
    $region44: #{tpu_custom_call.1} parent=1 // pred_region
      %458 = vsyncadd [#allocation8], 0
      %s459 = sshll.u32 [#allocation7], 4
      %s460 = int_to_ptr.vmem [resolvable:$true] %s459
      %s461 = sshll.u32 %s9, 4
      %s462 = int_to_ptr.hbm [resolvable:$true] %s461
      %467 = dma.vmem_to_hbm [thread:$0]  %s460, 256, %s462, [#allocation8], 128, 128, 8
    $region45: #{tpu_custom_call.1} parent=1 // pred_fallthru
      _
    // Predicated region
    $region46: #{tpu_custom_call.1} parent=1 // pred_check
      _
    $region47: #{tpu_custom_call.1} parent=1 // pred_check_branch
      %469 = sbr.rel (0) target = $region49
    $region48: #{tpu_custom_call.1} parent=1 // pred_region
      %471 = dma.done [#allocation5], 16
    $region49: #{tpu_custom_call.1} parent=1 // pred_fallthru
      _
    // Predicated region
    $region50: #{tpu_custom_call.1} parent=1 // pred_check
      _
    $region51: #{tpu_custom_call.1} parent=1 // pred_check_branch
      %473 = sbr.rel (0) target = $region53
    $region52: #{tpu_custom_call.1} parent=1 // pred_region
      %475 = dma.done [#allocation8], 256
    $region53: #{tpu_custom_call.1} parent=1 // pred_fallthru
      _
    %476 = vsyncpa [#allocation4], 1
    %477 = vsyncpa [#allocation5], 1
    %478 = vsyncpa [#allocation8], 1

</llo_original>
